<compile_context>
chip_gen: v7x
topology: tpu7x:2x2x1
jax: 0.10.0
libtpu: 0.0.40
codegen_flags: <defaults>
</compile_context>

<pallas_src>
import functools

import jax
import jax.numpy as jnp
from jax.experimental import pallas as pl
from jax.experimental.pallas import tpu as pltpu


def _triplet_kernel(a_ref, p_ref, n_ref, o_ref, *, margin, batch, block_rows, ragged):
    # Upcast to f32 so bf16 inputs reduce accurately (v5e has no bf16 VPU path).
    a = a_ref[...].astype(jnp.float32)
    p = p_ref[...].astype(jnp.float32)
    n = n_ref[...].astype(jnp.float32)

    # Each difference computed exactly once.
    dp = a - p
    dn = a - n
    dp2 = jnp.sum(dp * dp, axis=1, keepdims=True)   # (block_rows, 1)
    dn2 = jnp.sum(dn * dn, axis=1, keepdims=True)   # (block_rows, 1)
    d_p = jnp.sqrt(dp2)                              # EUP slot, off the memory path
    d_n = jnp.sqrt(dn2)

    losses = jnp.maximum(d_p - d_n + margin, 0.0)    # (block_rows, 1) hinge

    if ragged:
        # Trace-time gated: only the ragged case pays for iota/compare/select.
        # Keep this a select (not a multiply) — OOB rows may hold garbage/Inf.
        row = (pl.program_id(0) * block_rows
               + jax.lax.broadcasted_iota(jnp.int32, losses.shape, 0))
        losses = jnp.where(row < batch, losses, 0.0)

    o_ref[...] = losses


def _vmem_plan():
    """Generation-aware (budget_for_pipeline_buffers, scoped_vmem_limit) in bytes."""
    try:
        cap = pltpu.get_tpu_info().vmem_capacity_bytes
    except Exception:
        cap = 64 * 1024 * 1024          # conservative fallback (v7x-sized)
    budget = min(int(cap * 0.6), 48 * 1024 * 1024)   # double-buffered tile budget
    limit = min(int(cap * 0.75), 64 * 1024 * 1024)   # Mosaic scoped-VMEM limit
    return budget, limit


def _default_block_rows(D, itemsize, budget):
    # Lane-padded VMEM width of one input row in its native dtype.
    d_pad = max(128, -(-D // 128) * 128)
    # Per-row bytes for one buffer set: 3 inputs (native dtype) + the (rows, 1)
    # f32 output block whose last dim lane-pads to 128.
    row_bytes = 3 * d_pad * itemsize + 128 * 4
    tb = budget // (2 * row_bytes)       # x2: double-buffered pipeline
    return max(8, min(32768, (tb // 8) * 8))


def triplet_loss(f_anchor, f_positive, f_negative, margin, *, block_rows=None):
    """Pallas implementation of TripletLoss.forward. Returns a scalar (f32)."""
    B, D = f_anchor.shape
    itemsize = jnp.dtype(f_anchor.dtype).itemsize
    budget, vmem_limit = _vmem_plan()
    if block_rows is None:
        block_rows = _default_block_rows(D, itemsize, budget)
    if B <= block_rows:
        block_rows = B                   # single full-extent tile (any B allowed)
    num_tiles = pl.cdiv(B, block_rows)
    padded_rows = num_tiles * block_rows
    ragged = (B % block_rows) != 0

    kernel = functools.partial(
        _triplet_kernel,
        margin=float(margin),
        batch=B,
        block_rows=block_rows,
        ragged=ragged,
    )

    cost = pl.CostEstimate(
        flops=7 * B * D + 6 * B,          # subs, squares, row sums, hinge
        transcendentals=2 * B,            # two sqrt per row
        bytes_accessed=3 * B * D * itemsize + padded_rows * 4,
    )

    per_row = pl.pallas_call(
        kernel,
        out_shape=jax.ShapeDtypeStruct((padded_rows, 1), jnp.float32),
        grid_spec=pltpu.PrefetchScalarGridSpec(
            num_scalar_prefetch=0,
            grid=(num_tiles,),
            in_specs=[pl.BlockSpec((block_rows, D), lambda i: (i, 0))
                      for _ in range(3)],
            out_specs=pl.BlockSpec((block_rows, 1), lambda i: (i, 0)),
        ),
        compiler_params=pltpu.CompilerParams(
            dimension_semantics=("parallel",),   # disjoint output tiles -> megacore OK
            vmem_limit_bytes=vmem_limit,
        ),
        cost_estimate=cost,
    )(f_anchor, f_positive, f_negative)

    # Final reduction + mean scale on the tiny (padded_rows, 1) vector in the wrapper.
    return jnp.sum(per_row) * (1.0 / float(B))
    # TODO(synk): if xprof ever shows exposed DMA waits at these tile sizes, add
    # pipeline_mode=pl.Buffered(3) on the three input BlockSpecs and re-sweep.


def triplet_loss_ref(f_anchor, f_positive, f_negative, margin):
    a = f_anchor.astype(jnp.float32)
    p = f_positive.astype(jnp.float32)
    n = f_negative.astype(jnp.float32)
    d_p = jnp.sqrt(jnp.sum((a - p) ** 2, axis=1))
    d_n = jnp.sqrt(jnp.sum((a - n) ** 2, axis=1))
    return jnp.mean(jnp.maximum(d_p - d_n + margin, 0.0))


if __name__ == "__main__":
    margin = 0.5

    # Case 1: small batch matching the module convention (rows=samples, cols=coords).
    ka, kp, kn = jax.random.split(jax.random.PRNGKey(0), 3)
    B, D = 8, 32
    fa = jax.random.normal(ka, (B, D), dtype=jnp.float32)
    fp = jax.random.normal(kp, (B, D), dtype=jnp.float32)
    fneg = jax.random.normal(kn, (B, D), dtype=jnp.float32)
    out = jax.block_until_ready(triplet_loss(fa, fp, fneg, margin))
    ref = triplet_loss_ref(fa, fp, fneg, margin)
    assert jnp.allclose(out, ref, rtol=1e-5, atol=1e-5), (out, ref)

    # Case 2: exercise the tiled parallel grid with a ragged (masked) last tile.
    ka2, kp2, kn2 = jax.random.split(jax.random.PRNGKey(1), 3)
    B2, D2 = 300, 32
    fa2 = jax.random.normal(ka2, (B2, D2), dtype=jnp.float32)
    fp2 = jax.random.normal(kp2, (B2, D2), dtype=jnp.float32)
    fn2 = jax.random.normal(kn2, (B2, D2), dtype=jnp.float32)
    out2 = jax.block_until_ready(triplet_loss(fa2, fp2, fn2, margin, block_rows=64))
    ref2 = triplet_loss_ref(fa2, fp2, fn2, margin)
    assert jnp.allclose(out2, ref2, rtol=1e-5, atol=1e-5), (out2, ref2)

    # Case 3: bf16 inputs are upcast to f32 inside the kernel (dtype-aware tiling).
    out3 = jax.block_until_ready(
        triplet_loss(fa.astype(jnp.bfloat16), fp.astype(jnp.bfloat16),
                     fneg.astype(jnp.bfloat16), margin))
    ref3 = triplet_loss_ref(fa.astype(jnp.bfloat16), fp.astype(jnp.bfloat16),
                            fneg.astype(jnp.bfloat16), margin)
    assert jnp.allclose(out3, ref3, rtol=1e-4, atol=1e-4), (out3, ref3)

    print("KERNEL_OK")
</pallas_src>

<mosaic_0001>
module attributes {stable_mosaic.version = 11 : i64} {
  func.func @_triplet_kernel(%arg0: i32, %arg1: memref<8x32xf32, #tpu.memory_space<vmem>>, %arg2: memref<8x32xf32, #tpu.memory_space<vmem>>, %arg3: memref<8x32xf32, #tpu.memory_space<vmem>>, %arg4: memref<8x1xf32, #tpu.memory_space<vmem>>) attributes {dimension_semantics = [#tpu.dimension_semantics<parallel>], iteration_bounds = array<i64: 1>, scalar_prefetch = 0 : i64, scratch_operands = 0 : i64, tpu.core_type = #tpu.core_type<tc>, window_params = [{transform_indices = @transform_0, window_bounds = array<i64: 8, 32>}, {transform_indices = @transform_1, window_bounds = array<i64: 8, 32>}, {transform_indices = @transform_2, window_bounds = array<i64: 8, 32>}, {transform_indices = @transform_3, window_bounds = array<i64: 8, 1>}]} {
    %c0 = arith.constant 0 : index
    %c0_0 = arith.constant 0 : index
    %0 = vector.load %arg1[%c0, %c0_0] : memref<8x32xf32, #tpu.memory_space<vmem>>, vector<8x32xf32>
    %c0_1 = arith.constant 0 : index
    %c0_2 = arith.constant 0 : index
    %1 = vector.load %arg2[%c0_1, %c0_2] : memref<8x32xf32, #tpu.memory_space<vmem>>, vector<8x32xf32>
    %c0_3 = arith.constant 0 : index
    %c0_4 = arith.constant 0 : index
    %2 = vector.load %arg3[%c0_3, %c0_4] : memref<8x32xf32, #tpu.memory_space<vmem>>, vector<8x32xf32>
    %3 = arith.subf %0, %1 : vector<8x32xf32>
    %4 = arith.subf %0, %2 : vector<8x32xf32>
    %5 = arith.mulf %3, %3 : vector<8x32xf32>
    %cst = arith.constant dense<0.000000e+00> : vector<8xf32>
    %6 = vector.multi_reduction <add>, %5, %cst [1] : vector<8x32xf32> to vector<8xf32>
    %7 = vector.shape_cast %6 : vector<8xf32> to vector<8x1xf32>
    %8 = arith.mulf %4, %4 : vector<8x32xf32>
    %cst_5 = arith.constant dense<0.000000e+00> : vector<8xf32>
    %9 = vector.multi_reduction <add>, %8, %cst_5 [1] : vector<8x32xf32> to vector<8xf32>
    %10 = vector.shape_cast %9 : vector<8xf32> to vector<8x1xf32>
    %11 = math.sqrt %7 : vector<8x1xf32>
    %12 = math.sqrt %10 : vector<8x1xf32>
    %13 = arith.subf %11, %12 : vector<8x1xf32>
    %cst_6 = arith.constant 5.000000e-01 : f32
    %14 = vector.broadcast %cst_6 : f32 to vector<8x1xf32>
    %15 = arith.addf %13, %14 : vector<8x1xf32>
    %cst_7 = arith.constant 0.000000e+00 : f32
    %16 = vector.broadcast %cst_7 : f32 to vector<8x1xf32>
    %17 = arith.maximumf %15, %16 : vector<8x1xf32>
    %c0_8 = arith.constant 0 : index
    %c0_9 = arith.constant 0 : index
    %18 = vector.load %arg4[%c0_8, %c0_9] : memref<8x1xf32, #tpu.memory_space<vmem>>, vector<8x1xf32>
    tpu.vector_store %arg4[%c0_8, %c0_9], %17 {strides = array<i32>} : memref<8x1xf32, #tpu.memory_space<vmem>>, vector<8x1xf32>,
    return
  }
  func.func @transform_0(%arg0: i32) -> (i32, i32) {
    %c0_i32 = arith.constant 0 : i32
    %c0_i32_0 = arith.constant 0 : i32
    return %arg0, %c0_i32 : i32, i32
  }
  func.func @transform_1(%arg0: i32) -> (i32, i32) {
    %c0_i32 = arith.constant 0 : i32
    %c0_i32_0 = arith.constant 0 : i32
    return %arg0, %c0_i32 : i32, i32
  }
  func.func @transform_2(%arg0: i32) -> (i32, i32) {
    %c0_i32 = arith.constant 0 : i32
    %c0_i32_0 = arith.constant 0 : i32
    return %arg0, %c0_i32 : i32, i32
  }
  func.func @transform_3(%arg0: i32) -> (i32, i32) {
    %c0_i32 = arith.constant 0 : i32
    %c0_i32_0 = arith.constant 0 : i32
    return %arg0, %c0_i32 : i32, i32
  }
}

</mosaic_0001>

<llo_original>
// kernel: tpu_custom_call.1
$region0: #{tpu_custom_call.1}
  #allocation0 [shape = 'u32[]', space=smem, size = 0x4, offset = 0x4, fixed_abs, tag = 'smem constant byte address 0x4 - core index']
  #allocation1 [shape = 'u32[144,128]{1,0:T(1,128)}', space=vmem, size = 0x12000, scoped, tag = 'internal scratch']
  %s0 = inlined_call_operand.hbm [shape: f32[8,32], index: 0, kind: input, shape index: {}]
  %s1 = inlined_call_operand.hbm [shape: f32[8,32], index: 1, kind: input, shape index: {}]
  %s2 = inlined_call_operand.hbm [shape: f32[8,32], index: 2, kind: input, shape index: {}]
  %s3 = inlined_call_operand.vmem [shape: f32[8,1], index: 3, kind: output, shape index: {}]
  %s4 = sld [smem:[#allocation0]]
  $region34: #{tpu_custom_call.1} parent=0
    _
  %s6 = ssub.s32 1, %s4
  %s7 = scalar_select 0, %s6, %s4
  $region1: #{tpu_custom_call.1} parent=0
    #allocation2 [shape = 'u8[4096]{0}', space=vmem, size = 0x1000, scoped, tag = 'input window, operand 0, single buffered']
    #allocation3 [shape = 's32[1]{0}', space=sflag, size = 0x4, scoped, tag = 'scoped memory for tpu_custom_call.1']
    #allocation4 [shape = 'u8[4096]{0}', space=vmem, size = 0x1000, scoped, tag = 'input window, operand 1, single buffered']
    #allocation5 [shape = 's32[1]{0}', space=sflag, size = 0x4, scoped, tag = 'scoped memory for tpu_custom_call.1']
    #allocation6 [shape = 'u8[4096]{0}', space=vmem, size = 0x1000, scoped, tag = 'input window, operand 2, single buffered']
    %8 = vsyncpa [#allocation3], 0
    %9 = vsyncpa [#allocation5], 0
    // Predicated region
    $region2: #{tpu_custom_call.1} parent=1 // pred_check
      _
    $region3: #{tpu_custom_call.1} parent=1 // pred_check_branch
      %11 = sbr.rel (0) target = $region5
    $region4: #{tpu_custom_call.1} parent=1 // pred_region
      %s13 = ssub.s32 128, 128
      %14 = vsyncadd [#allocation3], %s13
      %s16 = sshll.u32 [#allocation2], 4
      %s17 = int_to_ptr.vmem [resolvable:$true] %s16
      %19 = dma.hbm_to_vmem [thread:$0]  %s0, 128, %s17, [#allocation3]
    $region5: #{tpu_custom_call.1} parent=1 // pred_fallthru
      _
    // Predicated region
    $region6: #{tpu_custom_call.1} parent=1 // pred_check
      _
    $region7: #{tpu_custom_call.1} parent=1 // pred_check_branch
      %21 = sbr.rel (0) target = $region9
    $region8: #{tpu_custom_call.1} parent=1 // pred_region
      %s23 = ssub.s32 128, 128
      %24 = vsyncadd [#allocation5], %s23
      %s26 = sshll.u32 [#allocation4], 4
      %s27 = int_to_ptr.vmem [resolvable:$true] %s26
      %29 = dma.hbm_to_vmem [thread:$0]  %s1, 128, %s27, [#allocation5]
    $region9: #{tpu_custom_call.1} parent=1 // pred_fallthru
      _
    // Predicated region
    $region10: #{tpu_custom_call.1} parent=1 // pred_check
      _
    $region11: #{tpu_custom_call.1} parent=1 // pred_check_branch
      %31 = sbr.rel (0) target = $region13
    $region12: #{tpu_custom_call.1} parent=1 // pred_region
      %s33 = ssub.s32 128, 128
      %34 = vsyncadd [#allocation5], %s33
      %s36 = sshll.u32 [#allocation6], 4
      %s37 = int_to_ptr.vmem [resolvable:$true] %s36
      %39 = dma.hbm_to_vmem [thread:$0]  %s2, 128, %s37, [#allocation5]
    $region13: #{tpu_custom_call.1} parent=1 // pred_fallthru
      _
    // Predicated region
    $region14: #{tpu_custom_call.1} parent=1 // pred_check
      _
    $region15: #{tpu_custom_call.1} parent=1 // pred_check_branch
      %41 = sbr.rel (0) target = $region17
    $region16: #{tpu_custom_call.1} parent=1 // pred_region
      %42 = dma.done [#allocation3], 128
    $region17: #{tpu_custom_call.1} parent=1 // pred_fallthru
      _
    // Predicated region
    $region18: #{tpu_custom_call.1} parent=1 // pred_check
      _
    $region19: #{tpu_custom_call.1} parent=1 // pred_check_branch
      %44 = sbr.rel (0) target = $region21
    $region20: #{tpu_custom_call.1} parent=1 // pred_region
      %45 = dma.done [#allocation5], 128
    $region21: #{tpu_custom_call.1} parent=1 // pred_fallthru
      _
    // Predicated region
    $region22: #{tpu_custom_call.1} parent=1 // pred_check
      _
    $region23: #{tpu_custom_call.1} parent=1 // pred_check_branch
      %47 = sbr.rel (0) target = $region25
    $region24: #{tpu_custom_call.1} parent=1 // pred_region
      %48 = dma.done [#allocation5], 128
    $region25: #{tpu_custom_call.1} parent=1 // pred_fallthru
      _
    %v49 = vld [vmem:[#allocation2] sm:$0xff]
    %v50 = vld [vmem:[#allocation4] sm:$0xff]
    %v51 = vld [vmem:[#allocation6] sm:$0xff]
    %v52 = vsub.f32 %v49, %v50
    %v53 = vsub.f32 %v49, %v51
    %v54 = vmul.f32 %v52, %v52
    %vm55 = vcmask 261120
    %v56 = vsel %vm55, %v54, 0.0
    %57 = vadd.xlane.f32.xlu0 %v56
    %v58 = vpop.xlane.xlu0 %57
    %v59 = vmul.f32 %v53, %v53
    %v60 = vsel %vm55, %v59, 0.0
    %61 = vadd.xlane.f32.xlu0 %v60
    %v62 = vpop.xlane.xlu0 %61
    %v63 = vrsqrt.pop %v58
    %v64 = vmul.f32 %v58, %v63
    %vm65 = vcmp.eq.f32.partialorder %v58, inf
    %v66 = vsel %vm65, %v58, %v64
    %vm67 = vcmp.eq.f32.partialorder %v58, 0.0
    %v68 = vand.u32 %v58, 2147483648
    %v69 = vsel %vm67, %v68, %v66
    %v70 = vrsqrt.pop %v62
    %v71 = vmul.f32 %v62, %v70
    %vm72 = vcmp.eq.f32.partialorder %v62, inf
    %v73 = vsel %vm72, %v62, %v71
    %vm74 = vcmp.eq.f32.partialorder %v62, 0.0
    %v75 = vand.u32 %v62, 2147483648
    %v76 = vsel %vm74, %v75, %v73
    %v77 = vsub.f32 %v69, %v76
    %v78 = vadd.f32 %v77, 0.5
    %v79 = vmax.f32 %v78, 0.0
    %vm80 = vcmask 7168
    %81 = vst.msk [vmem:[%s3] sm:$0xff] %vm80, %v79
    // Predicated region
    $region26: #{tpu_custom_call.1} parent=1 // pred_check
      _
    $region27: #{tpu_custom_call.1} parent=1 // pred_check_branch
      %83 = sbr.rel (0) target = $region29
    $region28: #{tpu_custom_call.1} parent=1 // pred_region
      _
    $region29: #{tpu_custom_call.1} parent=1 // pred_fallthru
      _
    // Predicated region
    $region30: #{tpu_custom_call.1} parent=1 // pred_check
      _
    $region31: #{tpu_custom_call.1} parent=1 // pred_check_branch
      %85 = sbr.rel (0) target = $region33
    $region32: #{tpu_custom_call.1} parent=1 // pred_region
      _
    $region33: #{tpu_custom_call.1} parent=1 // pred_fallthru
      _
    %86 = vsyncpa [#allocation3], 1
    %87 = vsyncpa [#allocation5], 1

</llo_original>
